<compile_context>
chip_gen: v5e
topology: v5e:2x2
jax: 0.10.0
libtpu: 0.0.40
codegen_flags: <defaults>
</compile_context>

<pallas_src>
import jax
import jax.numpy as jnp
from jax.experimental import pallas as pl
from jax.experimental.pallas import tpu as pltpu


def adapted_classifier_kernel(x_ref, wsum_ref, bsum_ref, wfc_ref, bfc_ref,
                              out_ref, acc_ref):
    """D-tiled: acc += x_k @ Wsum_k ; finalize: out = (acc + b_sum) @ W_fc + b_fc."""
    k = pl.program_id(0)

    @pl.when(k == 0)
    def _init():
        acc_ref[...] = jnp.zeros_like(acc_ref)

    # bf16 x / bf16 W_sum -> f32 accumulate on the MXU.
    acc_ref[...] += jnp.dot(x_ref[...], wsum_ref[...],
                            preferred_element_type=jnp.float32)

    @pl.when(k == pl.num_programs(0) - 1)
    def _finalize():
        # Biases + epilogue fc applied once (not per reduction step).
        h = acc_ref[...] + bsum_ref[...]                               # [B, 64] f32
        out = jnp.dot(h, wfc_ref[...],
                      preferred_element_type=jnp.float32) + bfc_ref[...]  # [B, NC_pad]
        out_ref[...] = out.astype(out_ref.dtype)


def adapted_classifier(x_nchw, w_a, b_a, w_c, b_c, w_fc, b_fc, *, block_k=512):
    """x_nchw: [B, C, H, W] float32 -> logits [B, num_classes] float32."""
    B = x_nchw.shape[0]
    x_flat = x_nchw.reshape(B, -1).astype(jnp.float32)   # [B, D] (NCHW flatten)
    D = x_flat.shape[1]
    feat = w_a.shape[1]                                   # 64 (fc input dim)
    nc = w_fc.shape[1]

    # ---- Algebraic fold of the two linear submodules (exact for linear ----
    # ---- adapter/classifier): one weight stream instead of two.        ----
    w_sum = (w_a + w_c).astype(jnp.float32)               # [D, feat]
    b_sum = (b_a + b_c).astype(jnp.float32)               # [1, feat]

    # ---- bf16 activation/weight stream, f32 accumulation in-kernel. ----
    x_bf = x_flat.astype(jnp.bfloat16)
    w_bf = w_sum.astype(jnp.bfloat16)

    # ---- Pad reduction dim so every grid step sees a full (B, tk)/(tk, feat)
    # tile (zero padding is exact for a matmul). ----
    tk = min(block_k, max(128, D))
    d_pad = ((D + tk - 1) // tk) * tk
    if d_pad != D:
        x_bf = jnp.pad(x_bf, ((0, 0), (0, d_pad - D)))
        w_bf = jnp.pad(w_bf, ((0, d_pad - D), (0, 0)))
    nk = d_pad // tk

    # ---- Lane-dense output: pad num_classes to a multiple of 128. ----
    nc_pad = ((nc + 127) // 128) * 128
    w_fc_p = jnp.pad(w_fc.astype(jnp.float32), ((0, 0), (0, nc_pad - nc)))
    b_fc_p = jnp.pad(b_fc.astype(jnp.float32).reshape(1, -1),
                     ((0, 0), (0, nc_pad - nc)))

    out_padded = pl.pallas_call(
        adapted_classifier_kernel,
        out_shape=jax.ShapeDtypeStruct((B, nc_pad), jnp.float32),
        grid_spec=pltpu.PrefetchScalarGridSpec(
            num_scalar_prefetch=0,
            grid=(nk,),
            in_specs=[
                pl.BlockSpec((B, tk), lambda k: (0, k)),        # x   [B, tk]  bf16
                pl.BlockSpec((tk, feat), lambda k: (k, 0)),     # Wsum[tk, 64] bf16
                pl.BlockSpec((1, feat), lambda k: (0, 0)),      # b_sum (resident)
                pl.BlockSpec((feat, nc_pad), lambda k: (0, 0)), # W_fc  (resident)
                pl.BlockSpec((1, nc_pad), lambda k: (0, 0)),    # b_fc  (resident)
            ],
            out_specs=pl.BlockSpec((B, nc_pad), lambda k: (0, 0)),
            scratch_shapes=[pltpu.VMEM((B, feat), jnp.float32)],  # f32 accumulator
        ),
        compiler_params=pltpu.CompilerParams(
            dimension_semantics=("arbitrary",),   # reduction axis
        ),
    )(x_bf, w_bf, b_sum, w_fc_p, b_fc_p)

    return out_padded[:, :nc]


if __name__ == "__main__":
    # Small shapes consistent with the module: fc expects 64-dim features.
    B, C, H, W = 2, 4, 16, 16
    D = C * H * W            # 1024
    FEAT = 64                # fc input dim (fixed by nn.Linear(64, num_classes))
    NUM_CLASSES = 10

    key = jax.random.PRNGKey(0)
    kx, ka, kba, kc, kbc, kfc, kbfc = jax.random.split(key, 7)

    x = jax.random.normal(kx, (B, C, H, W), dtype=jnp.float32)

    # Deterministic synthetic parameters (adapter / classifier / fc).
    w_a = jax.random.normal(ka, (D, FEAT), dtype=jnp.float32) * 0.02
    b_a = jax.random.normal(kba, (1, FEAT), dtype=jnp.float32) * 0.02
    w_c = jax.random.normal(kc, (D, FEAT), dtype=jnp.float32) * 0.02
    b_c = jax.random.normal(kbc, (1, FEAT), dtype=jnp.float32) * 0.02
    w_fc = jax.random.normal(kfc, (FEAT, NUM_CLASSES), dtype=jnp.float32) * 0.1
    b_fc = jax.random.normal(kbfc, (1, NUM_CLASSES), dtype=jnp.float32) * 0.1

    out = adapted_classifier(x, w_a, b_a, w_c, b_c, w_fc, b_fc)
    out = jax.block_until_ready(out)
    assert out.shape == (B, NUM_CLASSES)

    # Reference 1: true module semantics (separate adapter/classifier, full f32).
    x_flat = x.reshape(B, -1)
    z_a_ref = x_flat @ w_a + b_a
    z_ref = x_flat @ w_c + b_c
    ref_f32 = (z_a_ref + z_ref) @ w_fc + b_fc
    assert jnp.allclose(out, ref_f32, atol=1e-1, rtol=1e-1), \
        "mismatch vs f32 module reference (beyond bf16 tolerance)"

    # Reference 2: same bf16 input rounding as the kernel, f32 accumulation
    # (tight check of the kernel's arithmetic itself).
    x_bfr = x_flat.astype(jnp.bfloat16).astype(jnp.float32)
    w_bfr = (w_a + w_c).astype(jnp.bfloat16).astype(jnp.float32)
    ref_bf = (x_bfr @ w_bfr + (b_a + b_c)) @ w_fc + b_fc
    assert jnp.allclose(out, ref_bf, atol=2e-3, rtol=2e-3), \
        "mismatch vs bf16-matched reference"

    print("KERNEL_OK")
</pallas_src>

<mosaic_0001>
module attributes {stable_mosaic.version = 11 : i64} {
  func.func @adapted_classifier_kernel(%arg0: i32, %arg1: memref<2x512xbf16, #tpu.memory_space<vmem>>, %arg2: memref<512x64xbf16, #tpu.memory_space<vmem>>, %arg3: memref<1x64xf32, #tpu.memory_space<vmem>>, %arg4: memref<64x128xf32, #tpu.memory_space<vmem>>, %arg5: memref<1x128xf32, #tpu.memory_space<vmem>>, %arg6: memref<2x128xf32, #tpu.memory_space<vmem>>, %arg7: memref<2x64xf32, #tpu.memory_space<vmem>>) attributes {dimension_semantics = [#tpu.dimension_semantics<arbitrary>], iteration_bounds = array<i64: 2>, scalar_prefetch = 0 : i64, scratch_operands = 1 : i64, tpu.core_type = #tpu.core_type<tc>, window_params = [{transform_indices = @transform_0, window_bounds = array<i64: 2, 512>}, {transform_indices = @transform_1, window_bounds = array<i64: 512, 64>}, {pipeline_mode = #tpu.pipeline_mode<synchronous>, transform_indices = @transform_2, window_bounds = array<i64: 1, 64>}, {pipeline_mode = #tpu.pipeline_mode<synchronous>, transform_indices = @transform_3, window_bounds = array<i64: 64, 128>}, {pipeline_mode = #tpu.pipeline_mode<synchronous>, transform_indices = @transform_4, window_bounds = array<i64: 1, 128>}, {pipeline_mode = #tpu.pipeline_mode<synchronous>, transform_indices = @transform_5, window_bounds = array<i64: 2, 128>}]} {
    %c0_i32 = arith.constant 0 : i32
    %0 = arith.cmpi eq, %arg0, %c0_i32 : i32
    %1 = arith.extui %0 : i1 to i32
    %c0_i32_0 = arith.constant 0 : i32
    %2 = arith.cmpi ne, %1, %c0_i32_0 : i32
    scf.if %2 {
      %cst_9 = arith.constant 0.000000e+00 : f32
      %12 = vector.broadcast %cst_9 : f32 to vector<2x64xf32>
      %c0_10 = arith.constant 0 : index
      %c0_11 = arith.constant 0 : index
      %13 = vector.load %arg7[%c0_10, %c0_11] : memref<2x64xf32, #tpu.memory_space<vmem>>, vector<2x64xf32>
      tpu.vector_store %arg7[%c0_10, %c0_11], %12 {strides = array<i32>} : memref<2x64xf32, #tpu.memory_space<vmem>>, vector<2x64xf32>,
    } else {
    }
    %c0 = arith.constant 0 : index
    %c0_1 = arith.constant 0 : index
    %3 = vector.load %arg7[%c0, %c0_1] : memref<2x64xf32, #tpu.memory_space<vmem>>, vector<2x64xf32>
    %c0_2 = arith.constant 0 : index
    %c0_3 = arith.constant 0 : index
    %4 = vector.load %arg1[%c0_2, %c0_3] : memref<2x512xbf16, #tpu.memory_space<vmem>>, vector<2x512xbf16>
    %c0_4 = arith.constant 0 : index
    %c0_5 = arith.constant 0 : index
    %5 = vector.load %arg2[%c0_4, %c0_5] : memref<512x64xbf16, #tpu.memory_space<vmem>>, vector<512x64xbf16>
    %cst = arith.constant dense<0.000000e+00> : vector<2x64xf32>
    %6 = tpu.matmul %4, %5, %cst {dimension_numbers = #tpu.dot_dimension_numbers<[1], [0], [0], [1], [0, 0, 1, 1], [], []>} : vector<2x512xbf16>, vector<512x64xbf16>, vector<2x64xf32> -> vector<2x64xf32>
    %7 = arith.addf %3, %6 : vector<2x64xf32>
    %c0_6 = arith.constant 0 : index
    %c0_7 = arith.constant 0 : index
    %8 = vector.load %arg7[%c0_6, %c0_7] : memref<2x64xf32, #tpu.memory_space<vmem>>, vector<2x64xf32>
    tpu.vector_store %arg7[%c0_6, %c0_7], %7 {strides = array<i32>} : memref<2x64xf32, #tpu.memory_space<vmem>>, vector<2x64xf32>,
    %c1_i32 = arith.constant 1 : i32
    %9 = arith.cmpi eq, %arg0, %c1_i32 : i32
    %10 = arith.extui %9 : i1 to i32
    %c0_i32_8 = arith.constant 0 : i32
    %11 = arith.cmpi ne, %10, %c0_i32_8 : i32
    scf.if %11 {
      %c0_9 = arith.constant 0 : index
      %c0_10 = arith.constant 0 : index
      %12 = vector.load %arg7[%c0_9, %c0_10] : memref<2x64xf32, #tpu.memory_space<vmem>>, vector<2x64xf32>
      %c0_11 = arith.constant 0 : index
      %c0_12 = arith.constant 0 : index
      %13 = vector.load %arg3[%c0_11, %c0_12] : memref<1x64xf32, #tpu.memory_space<vmem>>, vector<1x64xf32>
      %14 = vector.broadcast %13 : vector<1x64xf32> to vector<2x64xf32>
      %15 = arith.addf %12, %14 : vector<2x64xf32>
      %c0_13 = arith.constant 0 : index
      %c0_14 = arith.constant 0 : index
      %16 = vector.load %arg4[%c0_13, %c0_14] : memref<64x128xf32, #tpu.memory_space<vmem>>, vector<64x128xf32>
      %cst_15 = arith.constant dense<0.000000e+00> : vector<2x128xf32>
      %17 = tpu.matmul %15, %16, %cst_15 {dimension_numbers = #tpu.dot_dimension_numbers<[1], [0], [0], [1], [0, 0, 1, 1], [], []>} : vector<2x64xf32>, vector<64x128xf32>, vector<2x128xf32> -> vector<2x128xf32>
      %c0_16 = arith.constant 0 : index
      %c0_17 = arith.constant 0 : index
      %18 = vector.load %arg5[%c0_16, %c0_17] : memref<1x128xf32, #tpu.memory_space<vmem>>, vector<1x128xf32>
      %19 = vector.broadcast %18 : vector<1x128xf32> to vector<2x128xf32>
      %20 = arith.addf %17, %19 : vector<2x128xf32>
      %c0_18 = arith.constant 0 : index
      %c0_19 = arith.constant 0 : index
      %21 = vector.load %arg6[%c0_18, %c0_19] : memref<2x128xf32, #tpu.memory_space<vmem>>, vector<2x128xf32>
      tpu.vector_store %arg6[%c0_18, %c0_19], %20 {strides = array<i32>} : memref<2x128xf32, #tpu.memory_space<vmem>>, vector<2x128xf32>,
    } else {
    }
    return
  }
  func.func @transform_0(%arg0: i32) -> (i32, i32) {
    %c0_i32 = arith.constant 0 : i32
    %c0_i32_0 = arith.constant 0 : i32
    return %c0_i32, %arg0 : i32, i32
  }
  func.func @transform_1(%arg0: i32) -> (i32, i32) {
    %c0_i32 = arith.constant 0 : i32
    %c0_i32_0 = arith.constant 0 : i32
    return %arg0, %c0_i32 : i32, i32
  }
  func.func @transform_2(%arg0: i32) -> (i32, i32) {
    %c0_i32 = arith.constant 0 : i32
    %c0_i32_0 = arith.constant 0 : i32
    %c0_i32_1 = arith.constant 0 : i32
    return %c0_i32, %c0_i32_0 : i32, i32
  }
  func.func @transform_3(%arg0: i32) -> (i32, i32) {
    %c0_i32 = arith.constant 0 : i32
    %c0_i32_0 = arith.constant 0 : i32
    %c0_i32_1 = arith.constant 0 : i32
    return %c0_i32, %c0_i32_0 : i32, i32
  }
  func.func @transform_4(%arg0: i32) -> (i32, i32) {
    %c0_i32 = arith.constant 0 : i32
    %c0_i32_0 = arith.constant 0 : i32
    %c0_i32_1 = arith.constant 0 : i32
    return %c0_i32, %c0_i32_0 : i32, i32
  }
  func.func @transform_5(%arg0: i32) -> (i32, i32) {
    %c0_i32 = arith.constant 0 : i32
    %c0_i32_0 = arith.constant 0 : i32
    %c0_i32_1 = arith.constant 0 : i32
    return %c0_i32, %c0_i32_0 : i32, i32
  }
}

</mosaic_0001>

<llo_original>
// kernel: tpu_custom_call.1
$region0: #{tpu_custom_call.1}
  #allocation0 [shape = 'u32[]', space=smem, size = 0x4, offset = 0x4, fixed_abs, tag = 'smem constant byte address 0x4 - core index']
  #allocation1 [shape = 'u32[72,128]{1,0:T(1,128)}', space=vmem, size = 0x9000, scoped, tag = 'internal scratch']
  #allocation2 [shape = 'f32[2,64]{1,0:T(2,128)}', space=vmem, size = 0x400, scoped, tag = 'scratch operand']
  %s0 = inlined_call_operand.vmem [shape: bf16[2,1024], index: 0, kind: input, shape index: {}]
  %s1 = inlined_call_operand.vmem [shape: bf16[1024,64], index: 1, kind: input, shape index: {}]
  %s2 = inlined_call_operand.vmem [shape: f32[1,64], index: 2, kind: input, shape index: {}]
  %s3 = inlined_call_operand.vmem [shape: f32[64,128], index: 3, kind: input, shape index: {}]
  %s4 = inlined_call_operand.vmem [shape: f32[1,128], index: 4, kind: input, shape index: {}]
  %s5 = inlined_call_operand.hbm [shape: f32[2,128], index: 5, kind: output, shape index: {}]
  %s6 = sld [smem:[#allocation0]]
  $region61: #{tpu_custom_call.1} parent=0
    _
  %s8 = ssub.s32 1, %s6
  %s9 = scalar_select 0, %s8, %s6
  $region1: #{tpu_custom_call.1} parent=0
    #allocation3 [shape = 'u8[1024]{0}', space=vmem, size = 0x400, scoped, tag = 'output window, operand 0, single buffered']
    #allocation4 [shape = 's32[2]{0}', space=sflag, size = 0x8, scoped, tag = 'scoped memory for tpu_custom_call.1']
    %10 = vsyncpa [#allocation4], 0
    loop: start=0, step=1, limit=4
    $region2: #{tpu_custom_call.1} parent=1 // loop_pre_header
      _
    $region3: #{tpu_custom_call.1} parent=1 // loop_header
      %s12 = sphi 0, %s16
      %p13 = scmp.ge.s32.totalorder %s12, 4
      %s22 = sphi 0, %s24
      %s25 = sphi 0, %s22
      %s26 = sphi 0, %s25
      %s42 = sphi 0, %s26
      %s48 = sphi 0, %s50
      %s51 = sphi 0, %s48
      %s52 = sphi 0, %s51
      %s68 = sphi 0, %s52
      %s72 = sphi 0, %s72
      %s74 = sphi 0, %s72
      %s75 = sphi 0, %s74
      %s89 = sphi 0, %s75
      %s93 = sphi 0, %s93
      %s95 = sphi 0, %s93
      %s96 = sphi 0, %s95
      %s110 = sphi 0, %s96
      %s114 = sphi 0, %s114
      %s116 = sphi 0, %s114
      %s117 = sphi 0, %s116
      %s131 = sphi 0, %s117
      %s135 = sphi 0, %s135
      %s137 = sphi 0, %s135
      %s138 = sphi 0, %s137
      %s152 = sphi 0, %s138
    $region4: #{tpu_custom_call.1} parent=1 // loop_header_branch
      %15 = sbr.rel (%p13) target = $region8
    $region5: #{tpu_custom_call.1} parent=1 // loop_body
      %s17 = ssub.s32 %s12, 1
      %s18 = ssub.s32 %s12, 2
      %s19 = sadd.s32 %s12, 1
      %s20 = ssub.s32 %s12, %s19
      %p21 = scmp.eq.s32.totalorder %s20, 0
      %s23 = sadd.s32 %s22, 1
      %s24 = scalar_select %p21, %s22, %s23
      %p27 = pneg %p21
      %p28 = scmp.eq.s32.totalorder %s12, 1
      %p29 = por %p27, %p28
      %p30 = scmp.ne.s32.totalorder %s22, %s25
      %p31 = scmp.eq.s32.totalorder %s12, 0
      %p32 = por %p30, %p31
      %p33 = scmp.ne.s32.totalorder %s22, %s25
      %p34 = scmp.eq.s32.totalorder %s17, 1
      %p35 = por %p33, %p34
      %p36 = scmp.ne.s32.totalorder %s25, %s26
      %p37 = scmp.eq.s32.totalorder %s17, 0
      %p38 = por %p36, %p37
      %p39 = scmp.ne.s32.totalorder %s25, %s26
      %p40 = scmp.eq.s32.totalorder %s18, 1
      %p41 = por %p39, %p40
      %p43 = scmp.ne.s32.totalorder %s26, %s42
      %p44 = scmp.eq.s32.totalorder %s18, 0
      %p45 = por %p43, %p44
      %s46 = ssub.s32 %s12, %s19
      %p47 = scmp.eq.s32.totalorder %s46, 0
      %s49 = sadd.s32 %s48, 1
      %s50 = scalar_select %p47, %s48, %s49
      %p53 = pneg %p47
      %p54 = scmp.eq.s32.totalorder %s12, 1
      %p55 = por %p53, %p54
      %p56 = scmp.ne.s32.totalorder %s48, %s51
      %p57 = scmp.eq.s32.totalorder %s12, 0
      %p58 = por %p56, %p57
      %p59 = scmp.ne.s32.totalorder %s48, %s51
      %p60 = scmp.eq.s32.totalorder %s17, 1
      %p61 = por %p59, %p60
      %p62 = scmp.ne.s32.totalorder %s51, %s52
      %p63 = scmp.eq.s32.totalorder %s17, 0
      %p64 = por %p62, %p63
      %p65 = scmp.ne.s32.totalorder %s51, %s52
      %p66 = scmp.eq.s32.totalorder %s18, 1
      %p67 = por %p65, %p66
      %p69 = scmp.ne.s32.totalorder %s52, %s68
      %p70 = scmp.eq.s32.totalorder %s18, 0
      %p71 = por %p69, %p70
      %s73 = sadd.s32 %s72, 1
      %p76 = scmp.eq.s32.totalorder %s12, 1
      %p77 = scmp.ne.s32.totalorder %s72, %s74
      %p78 = scmp.eq.s32.totalorder %s12, 0
      %p79 = por %p77, %p78
      %p80 = scmp.ne.s32.totalorder %s72, %s74
      %p81 = scmp.eq.s32.totalorder %s17, 1
      %p82 = por %p80, %p81
      %p83 = scmp.ne.s32.totalorder %s74, %s75
      %p84 = scmp.eq.s32.totalorder %s17, 0
      %p85 = por %p83, %p84
      %p86 = scmp.ne.s32.totalorder %s74, %s75
      %p87 = scmp.eq.s32.totalorder %s18, 1
      %p88 = por %p86, %p87
      %p90 = scmp.ne.s32.totalorder %s75, %s89
      %p91 = scmp.eq.s32.totalorder %s18, 0
      %p92 = por %p90, %p91
      %s94 = sadd.s32 %s93, 1
      %p97 = scmp.eq.s32.totalorder %s12, 1
      %p98 = scmp.ne.s32.totalorder %s93, %s95
      %p99 = scmp.eq.s32.totalorder %s12, 0
      %p100 = por %p98, %p99
      %p101 = scmp.ne.s32.totalorder %s93, %s95
      %p102 = scmp.eq.s32.totalorder %s17, 1
      %p103 = por %p101, %p102
      %p104 = scmp.ne.s32.totalorder %s95, %s96
      %p105 = scmp.eq.s32.totalorder %s17, 0
      %p106 = por %p104, %p105
      %p107 = scmp.ne.s32.totalorder %s95, %s96
      %p108 = scmp.eq.s32.totalorder %s18, 1
      %p109 = por %p107, %p108
      %p111 = scmp.ne.s32.totalorder %s96, %s110
      %p112 = scmp.eq.s32.totalorder %s18, 0
      %p113 = por %p111, %p112
      %s115 = sadd.s32 %s114, 1
      %p118 = scmp.eq.s32.totalorder %s12, 1
      %p119 = scmp.ne.s32.totalorder %s114, %s116
      %p120 = scmp.eq.s32.totalorder %s12, 0
      %p121 = por %p119, %p120
      %p122 = scmp.ne.s32.totalorder %s114, %s116
      %p123 = scmp.eq.s32.totalorder %s17, 1
      %p124 = por %p122, %p123
      %p125 = scmp.ne.s32.totalorder %s116, %s117
      %p126 = scmp.eq.s32.totalorder %s17, 0
      %p127 = por %p125, %p126
      %p128 = scmp.ne.s32.totalorder %s116, %s117
      %p129 = scmp.eq.s32.totalorder %s18, 1
      %p130 = por %p128, %p129
      %p132 = scmp.ne.s32.totalorder %s117, %s131
      %p133 = scmp.eq.s32.totalorder %s18, 0
      %p134 = por %p132, %p133
      %s136 = sadd.s32 %s135, 1
      %p139 = scmp.eq.s32.totalorder %s12, 1
      %p140 = scmp.ne.s32.totalorder %s135, %s137
      %p141 = scmp.eq.s32.totalorder %s12, 0
      %p142 = por %p140, %p141
      %p143 = scmp.ne.s32.totalorder %s135, %s137
      %p144 = scmp.eq.s32.totalorder %s17, 1
      %p145 = por %p143, %p144
      %p146 = scmp.ne.s32.totalorder %s137, %s138
      %p147 = scmp.eq.s32.totalorder %s17, 0
      %p148 = por %p146, %p147
      %p149 = scmp.ne.s32.totalorder %s137, %s138
      %p150 = scmp.eq.s32.totalorder %s18, 1
      %p151 = por %p149, %p150
      %p153 = scmp.ne.s32.totalorder %s138, %s152
      %p154 = scmp.eq.s32.totalorder %s18, 0
      %p155 = por %p153, %p154
      %p156 = scmp.le.s32.totalorder 1, %s12
      %p157 = scmp.lt.s32.totalorder %s12, 3
      %p158 = pnand %p156, %p157
      %p159 = pneg %p158
      // Predicated region
      $region9: #{tpu_custom_call.1} parent=5 // pred_check
        _
      $region10: #{tpu_custom_call.1} parent=5 // pred_check_branch
        %161 = sbr.rel (%p158) target = $region12
      $region11: #{tpu_custom_call.1} parent=5 // pred_region
        %s162 = ssub.s32 %s12, 1
        // Predicated region
        $region13: #{tpu_custom_call.1} parent=11 // pred_check
          %p163 = pneg %p85
        $region14: #{tpu_custom_call.1} parent=11 // pred_check_branch
          %165 = sbr.rel (%p163) target = $region16
        $region15: #{tpu_custom_call.1} parent=11 // pred_region
          _
        $region16: #{tpu_custom_call.1} parent=11 // pred_fallthru
          _
        // Predicated region
        $region17: #{tpu_custom_call.1} parent=11 // pred_check
          %p166 = pneg %p106
        $region18: #{tpu_custom_call.1} parent=11 // pred_check_branch
          %168 = sbr.rel (%p166) target = $region20
        $region19: #{tpu_custom_call.1} parent=11 // pred_region
          _
        $region20: #{tpu_custom_call.1} parent=11 // pred_fallthru
          _
        // Predicated region
        $region21: #{tpu_custom_call.1} parent=11 // pred_check
          %p169 = pneg %p127
        $region22: #{tpu_custom_call.1} parent=11 // pred_check_branch
          %171 = sbr.rel (%p169) target = $region24
        $region23: #{tpu_custom_call.1} parent=11 // pred_region
          _
        $region24: #{tpu_custom_call.1} parent=11 // pred_fallthru
          _
      $region12: #{tpu_custom_call.1} parent=5 // pred_fallthru
        _
      %p172 = scmp.lt.s32.totalorder %s12, 2
      // Predicated region
      $region25: #{tpu_custom_call.1} parent=5 // pred_check
        %p173 = pneg %p172
      $region26: #{tpu_custom_call.1} parent=5 // pred_check_branch
        %175 = sbr.rel (%p173) target = $region28
      $region27: #{tpu_custom_call.1} parent=5 // pred_region
        // Predicated region
        $region29: #{tpu_custom_call.1} parent=27 // pred_check
          %p176 = pneg %p32
        $region30: #{tpu_custom_call.1} parent=27 // pred_check_branch
          %178 = sbr.rel (%p176) target = $region32
        $region31: #{tpu_custom_call.1} parent=27 // pred_region
          %s179 = smul.u32 4, %s12
          %p180 = scmp.lt.s32.totalorder %s179, 7
          %s181 = scalar_select %p180, %s179, 7
          %s182 = scalar_lea.vmem %s0, %s181
          %s183 = smul.u32 4, %s12
        $region32: #{tpu_custom_call.1} parent=27 // pred_fallthru
          _
        // Predicated region
        $region33: #{tpu_custom_call.1} parent=27 // pred_check
          %p184 = pneg %p58
        $region34: #{tpu_custom_call.1} parent=27 // pred_check_branch
          %186 = sbr.rel (%p184) target = $region36
        $region35: #{tpu_custom_call.1} parent=27 // pred_region
          %s187 = smul.u32 64, %s12
          %p188 = scmp.lt.s32.totalorder %s187, 127
          %s189 = scalar_select %p188, %s187, 127
          %s190 = smul.addr %s189, 4
          %s191 = scalar_lea.vmem %s1, %s190
          %s192 = smul.u32 64, %s12
        $region36: #{tpu_custom_call.1} parent=27 // pred_fallthru
          _
      $region28: #{tpu_custom_call.1} parent=5 // pred_fallthru
        _
      %p193 = scmp.le.s32.totalorder 1, %s12
      %p194 = scmp.lt.s32.totalorder %s12, 3
      %p195 = pnand %p193, %p194
      %p196 = pneg %p195
      // Predicated region
      $region37: #{tpu_custom_call.1} parent=5 // pred_check
        _
      $region38: #{tpu_custom_call.1} parent=5 // pred_check_branch
        %198 = sbr.rel (%p195) target = $region40
      $region39: #{tpu_custom_call.1} parent=5 // pred_region
        %s199 = ssub.s32 %s12, 1
        %s200 = smul.u32 4, %s17
        %p201 = scmp.lt.s32.totalorder %s200, 7
        %s202 = scalar_select %p201, %s200, 7
        %s203 = scalar_lea.vmem %s0, %s202
        %p204 = pneg %p38
        %p205 = pneg %p35
        %s206 = smul.u32 64, %s17
        %p207 = scmp.lt.s32.totalorder %s206, 127
        %s208 = scalar_select %p207, %s206, 127
        %s209 = smul.addr %s208, 4
        %s210 = scalar_lea.vmem %s1, %s209
        %p211 = pneg %p64
        %p212 = pneg %p61
        %p213 = pneg %p85
        %p214 = pneg %p82
        %p215 = pneg %p106
        %p216 = pneg %p103
        %p217 = pneg %p127
        %p218 = pneg %p124
        %p219 = pneg %p148
        %p220 = pneg %p145
        %s221 = smul.u32 4, %s17
        %p222 = scmp.lt.s32.totalorder %s221, 7
        %s223 = scalar_select %p222, %s221, 7
        %s224 = scalar_lea.vmem %s0, %s223
        %s225 = smul.u32 4, %s17
        %s226 = smul.u32 64, %s17
        %p227 = scmp.lt.s32.totalorder %s226, 127
        %s228 = scalar_select %p227, %s226, 127
        %s229 = smul.addr %s228, 4
        %s230 = scalar_lea.vmem %s1, %s229
        %s231 = smul.u32 64, %s17
        %p232 = scmp.eq.s32.totalorder %s17, 0
        // Predicated region
        $region41: #{tpu_custom_call.1} parent=39 // pred_check
          %p233 = pneg %p232
        $region42: #{tpu_custom_call.1} parent=39 // pred_check_branch
          %235 = sbr.rel (%p233) target = $region44
        $region43: #{tpu_custom_call.1} parent=39 // pred_region
          %vm236 = vcmask 517120
          %237 = vst.msk [vmem:[#allocation2] sm:$0x3] %vm236, 0.0
        $region44: #{tpu_custom_call.1} parent=39 // pred_fallthru
          _
        %v238 = vld [vmem:[#allocation2] sm:$0x3]
        %v239 = vld [vmem:[%s224] sm:$0xf]
        %v240 = vld [vmem:[%s230] sm:$0xf]
        %v241 = vld [vmem:[%s230 + $0x4] sm:$0xf]
        %v242 = vld [vmem:[%s230 + $0x8] sm:$0xf]
        %v243 = vld [vmem:[%s230 + $0xc] sm:$0xf]
        %v244 = vld [vmem:[%s230 + $0x10] sm:$0xf]
        %v245 = vld [vmem:[%s230 + $0x14] sm:$0xf]
        %v246 = vld [vmem:[%s230 + $0x18] sm:$0xf]
        %v247 = vld [vmem:[%s230 + $0x1c] sm:$0xf]
        %v248 = vld [vmem:[%s230 + $0x20] sm:$0xf]
        %v249 = vld [vmem:[%s230 + $0x24] sm:$0xf]
        %v250 = vld [vmem:[%s230 + $0x28] sm:$0xf]
        %v251 = vld [vmem:[%s230 + $0x2c] sm:$0xf]
        %v252 = vld [vmem:[%s230 + $0x30] sm:$0xf]
        %v253 = vld [vmem:[%s230 + $0x34] sm:$0xf]
        %v254 = vld [vmem:[%s230 + $0x38] sm:$0xf]
        %v255 = vld [vmem:[%s230 + $0x3c] sm:$0xf]
        %v256 = vld [vmem:[%s230 + $0x40] sm:$0xf]
        %v257 = vld [vmem:[%s230 + $0x44] sm:$0xf]
        %v258 = vld [vmem:[%s230 + $0x48] sm:$0xf]
        %v259 = vld [vmem:[%s230 + $0x4c] sm:$0xf]
        %v260 = vld [vmem:[%s230 + $0x50] sm:$0xf]
        %v261 = vld [vmem:[%s230 + $0x54] sm:$0xf]
        %v262 = vld [vmem:[%s230 + $0x58] sm:$0xf]
        %v263 = vld [vmem:[%s230 + $0x5c] sm:$0xf]
        %v264 = vld [vmem:[%s230 + $0x60] sm:$0xf]
        %v265 = vld [vmem:[%s230 + $0x64] sm:$0xf]
        %v266 = vld [vmem:[%s230 + $0x68] sm:$0xf]
        %v267 = vld [vmem:[%s230 + $0x6c] sm:$0xf]
        %v268 = vld [vmem:[%s230 + $0x70] sm:$0xf]
        %v269 = vld [vmem:[%s230 + $0x74] sm:$0xf]
        %v270 = vld [vmem:[%s230 + $0x78] sm:$0xf]
        %v271 = vld [vmem:[%s230 + $0x7c] sm:$0xf]
        %v272 = vld [vmem:[%s230 + $0x80] sm:$0xf]
        %v273 = vld [vmem:[%s230 + $0x84] sm:$0xf]
        %v274 = vld [vmem:[%s230 + $0x88] sm:$0xf]
        %v275 = vld [vmem:[%s230 + $0x8c] sm:$0xf]
        %v276 = vld [vmem:[%s230 + $0x90] sm:$0xf]
        %v277 = vld [vmem:[%s230 + $0x94] sm:$0xf]
        %v278 = vld [vmem:[%s230 + $0x98] sm:$0xf]
        %v279 = vld [vmem:[%s230 + $0x9c] sm:$0xf]
        %v280 = vld [vmem:[%s230 + $0xa0] sm:$0xf]
        %v281 = vld [vmem:[%s230 + $0xa4] sm:$0xf]
        %v282 = vld [vmem:[%s230 + $0xa8] sm:$0xf]
        %v283 = vld [vmem:[%s230 + $0xac] sm:$0xf]
        %v284 = vld [vmem:[%s230 + $0xb0] sm:$0xf]
        %v285 = vld [vmem:[%s230 + $0xb4] sm:$0xf]
        %v286 = vld [vmem:[%s230 + $0xb8] sm:$0xf]
        %v287 = vld [vmem:[%s230 + $0xbc] sm:$0xf]
        %v288 = vld [vmem:[%s230 + $0xc0] sm:$0xf]
        %v289 = vld [vmem:[%s230 + $0xc4] sm:$0xf]
        %v290 = vld [vmem:[%s230 + $0xc8] sm:$0xf]
        %v291 = vld [vmem:[%s230 + $0xcc] sm:$0xf]
        %v292 = vld [vmem:[%s230 + $0xd0] sm:$0xf]
        %v293 = vld [vmem:[%s230 + $0xd4] sm:$0xf]
        %v294 = vld [vmem:[%s230 + $0xd8] sm:$0xf]
        %v295 = vld [vmem:[%s230 + $0xdc] sm:$0xf]
        %v296 = vld [vmem:[%s230 + $0xe0] sm:$0xf]
        %v297 = vld [vmem:[%s230 + $0xe4] sm:$0xf]
        %v298 = vld [vmem:[%s230 + $0xe8] sm:$0xf]
        %v299 = vld [vmem:[%s230 + $0xec] sm:$0xf]
        %v300 = vld [vmem:[%s230 + $0xf0] sm:$0xf]
        %v301 = vld [vmem:[%s230 + $0xf4] sm:$0xf]
        %v302 = vld [vmem:[%s230 + $0xf8] sm:$0xf]
        %v303 = vld [vmem:[%s230 + $0xfc] sm:$0xf]
        %305 = vst [vmem:[#allocation1] ss:$9 sm:$0xff] %v239
        %v306 = vld [vmem:[#allocation1] sm:$0xff]
        %v307 = vld [vmem:[#allocation1 + $0x9] sm:$0xff]
        %v308 = vld [vmem:[#allocation1 + $0x12] sm:$0xff]
        %v309 = vld [vmem:[#allocation1 + $0x1b] sm:$0xff]
        %v378 = vunpack.c.l.b16 %v240
        %v379 = vunpack.c.l.b16 %v241
        %v380 = vunpack.c.l.b16 %v242
        %v381 = vunpack.c.l.b16 %v243
        %v382 = vunpack.c.l.b16 %v244
        %v383 = vunpack.c.l.b16 %v245
        %v384 = vunpack.c.l.b16 %v246
        %v385 = vunpack.c.l.b16 %v247
        %v386 = vunpack.c.l.b16 %v248
        %v387 = vunpack.c.l.b16 %v249
        %v388 = vunpack.c.l.b16 %v250
        %v389 = vunpack.c.l.b16 %v251
        %v390 = vunpack.c.l.b16 %v252
        %v391 = vunpack.c.l.b16 %v253
        %v392 = vunpack.c.l.b16 %v254
        %v393 = vunpack.c.l.b16 %v255
        %v394 = vunpack.c.l.b16 %v256
        %v395 = vunpack.c.l.b16 %v257
        %v396 = vunpack.c.l.b16 %v258
        %v397 = vunpack.c.l.b16 %v259
        %v398 = vunpack.c.l.b16 %v260
        %v399 = vunpack.c.l.b16 %v261
        %v400 = vunpack.c.l.b16 %v262
        %v401 = vunpack.c.l.b16 %v263
        %v402 = vunpack.c.l.b16 %v264
        %v403 = vunpack.c.l.b16 %v265
        %v404 = vunpack.c.l.b16 %v266
        %v405 = vunpack.c.l.b16 %v267
        %v406 = vunpack.c.l.b16 %v268
        %v407 = vunpack.c.l.b16 %v269
        %v408 = vunpack.c.l.b16 %v270
        %v409 = vunpack.c.l.b16 %v271
        %v410 = vunpack.c.l.b16 %v272
        %v411 = vunpack.c.l.b16 %v273
        %v412 = vunpack.c.l.b16 %v274
        %v413 = vunpack.c.l.b16 %v275
        %v414 = vunpack.c.l.b16 %v276
        %v415 = vunpack.c.l.b16 %v277
        %v416 = vunpack.c.l.b16 %v278
        %v417 = vunpack.c.l.b16 %v279
        %v418 = vunpack.c.l.b16 %v280
        %v419 = vunpack.c.l.b16 %v281
        %v420 = vunpack.c.l.b16 %v282
        %v421 = vunpack.c.l.b16 %v283
        %v422 = vunpack.c.l.b16 %v284
        %v423 = vunpack.c.l.b16 %v285
        %v424 = vunpack.c.l.b16 %v286
        %v425 = vunpack.c.l.b16 %v287
        %v426 = vunpack.c.l.b16 %v288
        %v427 = vunpack.c.l.b16 %v289
        %v428 = vunpack.c.l.b16 %v290
        %v429 = vunpack.c.l.b16 %v291
        %v430 = vunpack.c.l.b16 %v292
        %v431 = vunpack.c.l.b16 %v293
        %v432 = vunpack.c.l.b16 %v294
        %v433 = vunpack.c.l.b16 %v295
        %v434 = vunpack.c.l.b16 %v296
        %v435 = vunpack.c.l.b16 %v297
        %v436 = vunpack.c.l.b16 %v298
        %v437 = vunpack.c.l.b16 %v299
        %v438 = vunpack.c.l.b16 %v300
        %v439 = vunpack.c.l.b16 %v301
        %v440 = vunpack.c.l.b16 %v302
        %v441 = vunpack.c.l.b16 %v303
        %v442 = vpack.c.b16 %v379, %v378
        %v443 = vpack.c.b16 %v381, %v380
        %v444 = vpack.c.b16 %v383, %v382
        %v445 = vpack.c.b16 %v385, %v384
        %v446 = vpack.c.b16 %v387, %v386
        %v447 = vpack.c.b16 %v389, %v388
        %v448 = vpack.c.b16 %v391, %v390
        %v449 = vpack.c.b16 %v393, %v392
        %v450 = vpack.c.b16 %v395, %v394
        %v451 = vpack.c.b16 %v397, %v396
        %v452 = vpack.c.b16 %v399, %v398
        %v453 = vpack.c.b16 %v401, %v400
        %v454 = vpack.c.b16 %v403, %v402
        %v455 = vpack.c.b16 %v405, %v404
        %v456 = vpack.c.b16 %v407, %v406
        %v457 = vpack.c.b16 %v409, %v408
        %v458 = vpack.c.b16 %v411, %v410
        %v459 = vpack.c.b16 %v413, %v412
        %v460 = vpack.c.b16 %v415, %v414
        %v461 = vpack.c.b16 %v417, %v416
        %v462 = vpack.c.b16 %v419, %v418
        %v463 = vpack.c.b16 %v421, %v420
        %v464 = vpack.c.b16 %v423, %v422
        %v465 = vpack.c.b16 %v425, %v424
        %v466 = vpack.c.b16 %v427, %v426
        %v467 = vpack.c.b16 %v429, %v428
        %v468 = vpack.c.b16 %v431, %v430
        %v469 = vpack.c.b16 %v433, %v432
        %v470 = vpack.c.b16 %v435, %v434
        %v471 = vpack.c.b16 %v437, %v436
        %v472 = vpack.c.b16 %v439, %v438
        %v473 = vpack.c.b16 %v441, %v440
        %506 = vmatpush.bf16.msra.mxu0 %v449
        %507 = vmatpush.bf16.msra.mxu0 %v448
        %508 = vmatpush.bf16.msra.mxu0 %v447
        %509 = vmatpush.bf16.msra.mxu0 %v446
        %510 = vmatpush.bf16.msra.mxu0 %v445
        %511 = vmatpush.bf16.msra.mxu0 %v444
        %512 = vmatpush.bf16.msra.mxu0 %v443
        %513 = vmatpush.bf16.msra.mxu0 %v442
        %514 = vmatmul.bf16.gmra.mxu0 %v306
        %v515 = vpop.f32.mrf.mxu0
        %v516 = vadd.f32 0.0, %v515
        %v517 = vpop.f32.mrf.mxu0
        %518 = vdwg.mxu0
        %519 = vmatpush.bf16.msra.mxu0 %v457
        %520 = vmatpush.bf16.msra.mxu0 %v456
        %521 = vmatpush.bf16.msra.mxu0 %v455
        %522 = vmatpush.bf16.msra.mxu0 %v454
        %523 = vmatpush.bf16.msra.mxu0 %v453
        %524 = vmatpush.bf16.msra.mxu0 %v452
        %525 = vmatpush.bf16.msra.mxu0 %v451
        %526 = vmatpush.bf16.msra.mxu0 %v450
        %527 = vmatmul.bf16.gmra.mxu0 %v307
        %v528 = vpop.f32.mrf.mxu0
        %v529 = vadd.f32 %v516, %v528
        %v530 = vpop.f32.mrf.mxu0
        %531 = vdwg.mxu0
        %532 = vmatpush.bf16.msra.mxu0 %v465
        %533 = vmatpush.bf16.msra.mxu0 %v464
        %534 = vmatpush.bf16.msra.mxu0 %v463
        %535 = vmatpush.bf16.msra.mxu0 %v462
        %536 = vmatpush.bf16.msra.mxu0 %v461
        %537 = vmatpush.bf16.msra.mxu0 %v460
        %538 = vmatpush.bf16.msra.mxu0 %v459
        %539 = vmatpush.bf16.msra.mxu0 %v458
        %540 = vmatmul.bf16.gmra.mxu0 %v308
        %v541 = vpop.f32.mrf.mxu0
        %v542 = vadd.f32 %v529, %v541
        %v543 = vpop.f32.mrf.mxu0
        %544 = vdwg.mxu0
        %545 = vmatpush.bf16.msra.mxu0 %v473
        %546 = vmatpush.bf16.msra.mxu0 %v472
        %547 = vmatpush.bf16.msra.mxu0 %v471
        %548 = vmatpush.bf16.msra.mxu0 %v470
        %549 = vmatpush.bf16.msra.mxu0 %v469
        %550 = vmatpush.bf16.msra.mxu0 %v468
        %551 = vmatpush.bf16.msra.mxu0 %v467
        %552 = vmatpush.bf16.msra.mxu0 %v466
        %553 = vmatmul.bf16.gmra.mxu0 %v309
        %v554 = vpop.f32.mrf.mxu0
        %v555 = vadd.f32 %v542, %v554
        %v556 = vpop.f32.mrf.mxu0
        %557 = vdwg.mxu0
        %v558 = vadd.f32 %v238, %v555
        %vm559 = vcmask 517120
        %560 = vst.msk [vmem:[#allocation2] sm:$0x3] %vm559, %v558
        %p561 = scmp.eq.s32.totalorder %s17, 1
        // Predicated region
        $region45: #{tpu_custom_call.1} parent=39 // pred_check
          %p562 = pneg %p561
        $region46: #{tpu_custom_call.1} parent=39 // pred_check_branch
          %564 = sbr.rel (%p562) target = $region48
        $region47: #{tpu_custom_call.1} parent=39 // pred_region
          %v565 = vld [vmem:[#allocation2] sm:$0x3]
          %v566 = vld [vmem:[%s2] sm:$0x1]
          %v568 = vperm.slane %v566, 0
          %v570 = vadd.f32 %v565, %v568
          %v571 = vld [vmem:[%s3] sm:$0xff]
          %v572 = vld [vmem:[%s3 + $0x8] sm:$0xff]
          %v573 = vld [vmem:[%s3 + $0x10] sm:$0xff]
          %v574 = vld [vmem:[%s3 + $0x18] sm:$0xff]
          %v575 = vld [vmem:[%s3 + $0x20] sm:$0xff]
          %v576 = vld [vmem:[%s3 + $0x28] sm:$0xff]
          %v577 = vld [vmem:[%s3 + $0x30] sm:$0xff]
          %v578 = vld [vmem:[%s3 + $0x38] sm:$0xff]
          %v579 = vld [vmem:[%s4] sm:$0x1]
          %v581 = vperm.slane %v579, 0
          %vm583 = vcmask 523264
          %v585 = vsel %vm583, %v570, 0
          %587 = vmatpush.msra.mxu0 0.0
          %588 = vmatpush.msra.mxu0 0.0
          %589 = vmatpush.msra.mxu0 0.0
          %590 = vmatpush.msra.mxu0 0.0
          %591 = vmatpush.msra.mxu0 0.0
          %592 = vmatpush.msra.mxu0 0.0
          %593 = vmatpush.msra.mxu0 0.0
          %594 = vmatpush.msra.mxu0 0.0
          %595 = vmatpush.msra.mxu0 %v578
          %596 = vmatpush.msra.mxu0 %v577
          %597 = vmatpush.msra.mxu0 %v576
          %598 = vmatpush.msra.mxu0 %v575
          %599 = vmatpush.msra.mxu0 %v574
          %600 = vmatpush.msra.mxu0 %v573
          %601 = vmatpush.msra.mxu0 %v572
          %602 = vmatpush.msra.mxu0 %v571
          %603 = vmatmul.f32.gmra.mxu0 %v585
          %v604 = vpop.f32.mrf.mxu0
          %v605 = vadd.f32 %v581, %v604
          %606 = vdwg.mxu0
          %607 = vst [vmem:[#allocation3] sm:$0x3] %v605
        $region48: #{tpu_custom_call.1} parent=39 // pred_fallthru
          _
        // Predicated region
        $region49: #{tpu_custom_call.1} parent=39 // pred_check
          %p608 = pneg %p145
        $region50: #{tpu_custom_call.1} parent=39 // pred_check_branch
          %610 = sbr.rel (%p608) target = $region52
        $region51: #{tpu_custom_call.1} parent=39 // pred_region
          %612 = vsyncadd [#allocation4], 0
          %s614 = sshll.u32 [#allocation3], 4
          %s615 = int_to_ptr.vmem [resolvable:$true] %s614
          %s616 = sshll.u32 %s5, 4
          %s617 = int_to_ptr.hbm [resolvable:$true] %s616
          %619 = dma.vmem_to_hbm [thread:$0]  %s615, 32, %s617, [#allocation4]
        $region52: #{tpu_custom_call.1} parent=39 // pred_fallthru
          _
        // Predicated region
        $region53: #{tpu_custom_call.1} parent=39 // pred_check
          %p620 = pneg %p145
        $region54: #{tpu_custom_call.1} parent=39 // pred_check_branch
          %622 = sbr.rel (%p620) target = $region56
        $region55: #{tpu_custom_call.1} parent=39 // pred_region
          %624 = dma.done [#allocation4], 32
        $region56: #{tpu_custom_call.1} parent=39 // pred_fallthru
          _
      $region40: #{tpu_custom_call.1} parent=5 // pred_fallthru
        _
      %p625 = scmp.le.s32.totalorder 2, %s12
      // Predicated region
      $region57: #{tpu_custom_call.1} parent=5 // pred_check
        %p626 = pneg %p625
      $region58: #{tpu_custom_call.1} parent=5 // pred_check_branch
        %628 = sbr.rel (%p626) target = $region60
      $region59: #{tpu_custom_call.1} parent=5 // pred_region
        %s629 = ssub.s32 %s12, 2
      $region60: #{tpu_custom_call.1} parent=5 // pred_fallthru
        _
    $region6: #{tpu_custom_call.1} parent=1 // loop_footer
      %s16 = sadd.s32 1, %s12
    $region7: #{tpu_custom_call.1} parent=1 // loop_footer_branch
      %11 = sbr.rel target = $region3
    $region8: #{tpu_custom_call.1} parent=1 // loop_exit
      _
    %630 = vsyncpa [#allocation4], 1
    %s631 = scalar_lea.sflag [#allocation4], 1
    %632 = vsyncpa %s631, 1

</llo_original>
